<compile_context>
chip_gen: v7x
topology: tpu7x:2x2x1
jax: 0.10.0
libtpu: 0.0.40
codegen_flags: <defaults>
</compile_context>

<pallas_src>
import functools

import jax
import jax.numpy as jnp
from jax.experimental import pallas as pl
from jax.experimental.pallas import tpu as pltpu


def _round_up(x: int, m: int) -> int:
    return (x + m - 1) // m * m


def _cdiv(a: int, b: int) -> int:
    return (a + b - 1) // b


def _tpu_config():
    """Per-generation tuning knobs (pad alignment, batch tile, VMEM clamp)."""
    try:
        kind = jax.devices()[0].device_kind.lower()
    except Exception:
        kind = ""
    if "v5" in kind:
        # v5e: 4x128^2 MXU, 128 MiB physical VMEM, 1 TensorCore.
        return dict(align=128, tb=128, vmem_cap=100 << 20, two_tc=False)
    if "v7" in kind or "tpu7" in kind or "7x" in kind:
        # v7x: 2x256^2 MXU, 64 MiB physical VMEM per TC, 2 TensorCores.
        return dict(align=256, tb=256, vmem_cap=56 << 20, two_tc=True)
    # v6e (and default): 2x256^2 MXU, 128 MiB physical VMEM, 1 TensorCore.
    return dict(align=256, tb=256, vmem_cap=100 << 20, two_tc=False)


def _pick_hid_tile(hid_p: int, target: int) -> int:
    """Largest multiple of 128 that divides hid_p and is <= target (min 128)."""
    n = hid_p // 128
    best = 128
    for d in range(1, n + 1):
        if n % d == 0 and d * 128 <= target:
            best = d * 128
    return best


def _vmem_estimate(tb, in_p, thid, out_p, itm_x, itm_w, wbuf):
    return (2 * tb * in_p * itm_x            # x tile (double-buffered)
            + wbuf * in_p * thid * itm_w     # streamed w1 tile
            + wbuf * thid * out_p * itm_w    # streamed w2 tile
            + 2 * thid * 4 + out_p * 4       # biases
            + 2 * tb * out_p * itm_x         # out tile (double-buffered)
            + tb * out_p * 4                 # fp32 accumulator scratch
            + tb * thid * 4)                 # fp32 intermediate h


def mlp_fw_kernel(x_ref, w1_ref, b1_ref, w2_ref, b2_ref, o_ref, acc_ref):
    """One (batch tile, hid tile) step: partial fc2(relu(fc1(x))) accumulate."""
    k = pl.program_id(1)

    @pl.when(k == 0)
    def _():
        acc_ref[...] = jnp.zeros_like(acc_ref)

    x = x_ref[...].astype(w1_ref.dtype)                     # bf16 or fp32 MXU input
    h = jnp.dot(x, w1_ref[...], preferred_element_type=jnp.float32)
    h = jnp.maximum(h + b1_ref[...], 0.0)                   # act_type='relu'
    acc_ref[...] += jnp.dot(h.astype(w2_ref.dtype), w2_ref[...],
                            preferred_element_type=jnp.float32)

    @pl.when(k == pl.num_programs(1) - 1)
    def _():
        o_ref[...] = (acc_ref[...] + b2_ref[...]).astype(o_ref.dtype)


def prepare_mlp_params(w1, b1, w2, b2, *, align=None, use_bf16=False):
    """One-time parameter prep (NOT per forward pass).

    PyTorch layout: w1 (hid, in), w2 (out, hid).  Pre-transpose to (in, hid) /
    (hid, out) and zero-pad every dim to a multiple of `align` (128 on v5e,
    256 on v6e/v7x) so kernel tiles are lane-dense and MXU passes are full.
    With use_bf16=True the matmul inputs are stored bf16 (fp32 accumulate in
    the kernel); biases stay fp32.
    """
    if align is None:
        align = _tpu_config()["align"]
    hid_ch, in_ch = w1.shape
    out_ch = w2.shape[0]
    in_p = _round_up(in_ch, align)
    hid_p = _round_up(hid_ch, align)
    out_p = _round_up(out_ch, align)

    w_dtype = jnp.bfloat16 if use_bf16 else w1.dtype
    w1_t = jnp.zeros((in_p, hid_p), w_dtype).at[:in_ch, :hid_ch].set(
        w1.T.astype(w_dtype))
    b1_p = jnp.zeros((1, hid_p), jnp.float32).at[0, :hid_ch].set(
        b1.astype(jnp.float32))
    w2_t = jnp.zeros((hid_p, out_p), w_dtype).at[:hid_ch, :out_ch].set(
        w2.T.astype(w_dtype))
    b2_p = jnp.zeros((1, out_p), jnp.float32).at[0, :out_ch].set(
        b2.astype(jnp.float32))
    return w1_t, b1_p, w2_t, b2_p


@functools.partial(jax.jit,
                   static_argnames=("out_ch", "tb", "thid_target",
                                    "return_padded"))
def mlp_fw(x, params, *, out_ch: int, tb: int | None = None,
           thid_target: int = 512, return_padded: bool = False):
    """x: (B, in_ch); params from prepare_mlp_params(); returns (B, out_ch).

    With return_padded=True the (Bp, out_p) buffer is returned directly
    (padded-I/O fast path; skips the output slice copy).
    """
    w1_t, b1_p, w2_t, b2_p = params
    B, in_ch = x.shape
    in_p, hid_p = w1_t.shape
    out_p = w2_t.shape[1]

    cfg = _tpu_config()
    if tb is None:
        tb = cfg["tb"]

    # --- batch (M) tiling: divisor-aware to minimise padding for ragged B ---
    n_m = max(1, _cdiv(B, tb))
    tb_eff = _round_up(_cdiv(B, n_m), 8)
    # v7x has 2 TensorCores; make sure the "parallel" batch axis has >= 2 steps.
    if cfg["two_tc"] and _cdiv(B, tb_eff) < 2 and B > 8:
        tb_eff = _round_up(_cdiv(B, 2), 8)
    Bp = _round_up(B, tb_eff)
    n_m = Bp // tb_eff

    # --- hidden (K) tiling: keep VMEM under the per-generation cap ---------
    itm_x = jnp.dtype(x.dtype).itemsize
    itm_w = jnp.dtype(w1_t.dtype).itemsize
    thid = _pick_hid_tile(hid_p, thid_target)
    while True:
        nk = hid_p // thid
        wbuf = 1 if nk == 1 else min(nk, 3)   # resident when not tiled
        vmem_est = _vmem_estimate(tb_eff, in_p, thid, out_p, itm_x, itm_w, wbuf)
        if vmem_est <= cfg["vmem_cap"] or thid <= 128:
            break
        thid = _pick_hid_tile(hid_p, thid // 2)

    vmem_limit = int(min(max(2 * vmem_est, 32 << 20), cfg["vmem_cap"]))

    # --- zero-pad x (padded rows/cols contribute nothing) -------------------
    if (Bp, in_p) != (B, in_ch):
        x_p = jnp.zeros((Bp, in_p), x.dtype).at[:B, :in_ch].set(x)
    else:
        x_p = x

    flops = 2 * Bp * (in_p * hid_p + hid_p * out_p)
    bytes_accessed = (itm_x * (Bp * in_p + Bp * out_p)
                      + itm_w * n_m * (in_p * hid_p + hid_p * out_p)
                      + 4 * (hid_p + out_p))

    out_full = pl.pallas_call(
        mlp_fw_kernel,
        out_shape=jax.ShapeDtypeStruct((Bp, out_p), x.dtype),
        grid_spec=pltpu.PrefetchScalarGridSpec(
            num_scalar_prefetch=0,
            grid=(n_m, nk),
            in_specs=[
                # x tile: constant across k -> fetched once per batch step.
                pl.BlockSpec((tb_eff, in_p), lambda i, k: (i, 0)),
                # streamed w1 tile (in_p, thid).
                pl.BlockSpec((in_p, thid), lambda i, k: (0, k),
                             pipeline_mode=pl.Buffered(wbuf)),
                # b1 tile (1, thid).
                pl.BlockSpec((1, thid), lambda i, k: (0, k)),
                # streamed w2 tile (thid, out_p).
                pl.BlockSpec((thid, out_p), lambda i, k: (k, 0),
                             pipeline_mode=pl.Buffered(wbuf)),
                # b2 (resident).
                pl.BlockSpec((1, out_p), lambda i, k: (0, 0),
                             pipeline_mode=pl.Buffered(1)),
            ],
            out_specs=pl.BlockSpec((tb_eff, out_p), lambda i, k: (i, 0)),
            scratch_shapes=[pltpu.VMEM((tb_eff, out_p), jnp.float32)],
        ),
        compiler_params=pltpu.CompilerParams(
            dimension_semantics=("parallel", "arbitrary"),
            vmem_limit_bytes=vmem_limit),
        cost_estimate=pl.CostEstimate(flops=flops, transcendentals=0,
                                      bytes_accessed=bytes_accessed),
    )(x_p, w1_t, b1_p, w2_t, b2_p)

    if return_padded:
        return out_full
    return out_full[:B, :out_ch]


def _init_linear(key, out_features, in_features, dtype=jnp.float32):
    # Deterministic PyTorch-style init: U(-1/sqrt(fan_in), 1/sqrt(fan_in)).
    kw, kb = jax.random.split(key)
    bound = 1.0 / (in_features ** 0.5)
    w = jax.random.uniform(kw, (out_features, in_features), dtype,
                           minval=-bound, maxval=bound)
    b = jax.random.uniform(kb, (out_features,), dtype,
                           minval=-bound, maxval=bound)
    return w, b


if __name__ == "__main__":
    # Small shapes consistent with MLPFw(in_ch, hid_ch, out_ch).
    B, in_ch, hid_ch, out_ch = 16, 16, 32, 8

    key = jax.random.PRNGKey(0)
    kx, k1, k2 = jax.random.split(key, 3)

    x = jax.random.normal(kx, (B, in_ch), jnp.float32)
    w1, b1 = _init_linear(k1, hid_ch, in_ch)   # fc1: Linear(in_ch, hid_ch)
    w2, b2 = _init_linear(k2, out_ch, hid_ch)  # fc2: Linear(hid_ch, out_ch)

    # Pure-JAX reference (matches PyTorch forward: fc2(relu(fc1(x)))).
    ref = jnp.maximum(x @ w1.T + b1, 0.0) @ w2.T + b2

    # fp32 path: exact parity with the PyTorch module.
    params = prepare_mlp_params(w1, b1, w2, b2, use_bf16=False)
    out = jax.block_until_ready(mlp_fw(x, params, out_ch=out_ch))
    assert out.shape == (B, out_ch)
    assert jnp.allclose(out, ref, atol=1e-5, rtol=1e-5), "fp32 mismatch vs reference"

    # bf16-matmul fast path (fp32 accumulate): perf default for production.
    params_bf16 = prepare_mlp_params(w1, b1, w2, b2, use_bf16=True)
    out_bf16 = jax.block_until_ready(mlp_fw(x, params_bf16, out_ch=out_ch))
    assert out_bf16.shape == (B, out_ch)
    assert jnp.allclose(out_bf16, ref, atol=1e-1, rtol=1e-1), "bf16 mismatch vs reference"

    # TODO(synk): the LinearFw `.fast` (MAML-style fast-weight) override is a
    # training-time mechanism; this kernel implements the standard forward
    # (weights passed in are whichever set the caller wants, so .fast weights
    # can simply be fed through prepare_mlp_params).

    print("KERNEL_OK")
</pallas_src>

<mosaic_0001>
module attributes {stable_mosaic.version = 11 : i64} {
  func.func @mlp_fw_kernel(%arg0: i32, %arg1: i32, %arg2: memref<16x256xf32, #tpu.memory_space<vmem>>, %arg3: memref<256x256xf32, #tpu.memory_space<vmem>>, %arg4: memref<1x256xf32, #tpu.memory_space<vmem>>, %arg5: memref<256x256xf32, #tpu.memory_space<vmem>>, %arg6: memref<1x256xf32, #tpu.memory_space<vmem>>, %arg7: memref<16x256xf32, #tpu.memory_space<vmem>>, %arg8: memref<16x256xf32, #tpu.memory_space<vmem>>) attributes {dimension_semantics = [#tpu.dimension_semantics<parallel>, #tpu.dimension_semantics<arbitrary>], iteration_bounds = array<i64: 1, 1>, scalar_prefetch = 0 : i64, scratch_operands = 1 : i64, tpu.core_type = #tpu.core_type<tc>, window_params = [{transform_indices = @transform_0, window_bounds = array<i64: 16, 256>}, {pipeline_mode = #tpu.pipeline_mode<synchronous>, transform_indices = @transform_1, window_bounds = array<i64: 256, 256>}, {transform_indices = @transform_2, window_bounds = array<i64: 1, 256>}, {pipeline_mode = #tpu.pipeline_mode<synchronous>, transform_indices = @transform_3, window_bounds = array<i64: 256, 256>}, {pipeline_mode = #tpu.pipeline_mode<synchronous>, transform_indices = @transform_4, window_bounds = array<i64: 1, 256>}, {transform_indices = @transform_5, window_bounds = array<i64: 16, 256>}]} {
    %c0_i32 = arith.constant 0 : i32
    %0 = arith.cmpi eq, %arg1, %c0_i32 : i32
    %1 = arith.extui %0 : i1 to i32
    %c0_i32_0 = arith.constant 0 : i32
    %2 = arith.cmpi ne, %1, %c0_i32_0 : i32
    scf.if %2 {
      %cst_16 = arith.constant 0.000000e+00 : f32
      %19 = vector.broadcast %cst_16 : f32 to vector<16x256xf32>
      %c0_17 = arith.constant 0 : index
      %c0_18 = arith.constant 0 : index
      %20 = vector.load %arg8[%c0_17, %c0_18] : memref<16x256xf32, #tpu.memory_space<vmem>>, vector<16x256xf32>
      tpu.vector_store %arg8[%c0_17, %c0_18], %19 {strides = array<i32>} : memref<16x256xf32, #tpu.memory_space<vmem>>, vector<16x256xf32>,
    } else {
    }
    %c0 = arith.constant 0 : index
    %c0_1 = arith.constant 0 : index
    %3 = vector.load %arg2[%c0, %c0_1] : memref<16x256xf32, #tpu.memory_space<vmem>>, vector<16x256xf32>
    %c0_2 = arith.constant 0 : index
    %c0_3 = arith.constant 0 : index
    %4 = vector.load %arg3[%c0_2, %c0_3] : memref<256x256xf32, #tpu.memory_space<vmem>>, vector<256x256xf32>
    %cst = arith.constant dense<0.000000e+00> : vector<16x256xf32>
    %5 = tpu.matmul %3, %4, %cst {dimension_numbers = #tpu.dot_dimension_numbers<[1], [0], [0], [1], [0, 0, 1, 1], [], []>} : vector<16x256xf32>, vector<256x256xf32>, vector<16x256xf32> -> vector<16x256xf32>
    %c0_4 = arith.constant 0 : index
    %c0_5 = arith.constant 0 : index
    %6 = vector.load %arg4[%c0_4, %c0_5] : memref<1x256xf32, #tpu.memory_space<vmem>>, vector<1x256xf32>
    %7 = vector.broadcast %6 : vector<1x256xf32> to vector<16x256xf32>
    %8 = arith.addf %5, %7 : vector<16x256xf32>
    %cst_6 = arith.constant 0.000000e+00 : f32
    %9 = vector.broadcast %cst_6 : f32 to vector<16x256xf32>
    %10 = arith.maximumf %8, %9 : vector<16x256xf32>
    %c0_7 = arith.constant 0 : index
    %c0_8 = arith.constant 0 : index
    %11 = vector.load %arg8[%c0_7, %c0_8] : memref<16x256xf32, #tpu.memory_space<vmem>>, vector<16x256xf32>
    %c0_9 = arith.constant 0 : index
    %c0_10 = arith.constant 0 : index
    %12 = vector.load %arg5[%c0_9, %c0_10] : memref<256x256xf32, #tpu.memory_space<vmem>>, vector<256x256xf32>
    %cst_11 = arith.constant dense<0.000000e+00> : vector<16x256xf32>
    %13 = tpu.matmul %10, %12, %cst_11 {dimension_numbers = #tpu.dot_dimension_numbers<[1], [0], [0], [1], [0, 0, 1, 1], [], []>} : vector<16x256xf32>, vector<256x256xf32>, vector<16x256xf32> -> vector<16x256xf32>
    %14 = arith.addf %11, %13 : vector<16x256xf32>
    %c0_12 = arith.constant 0 : index
    %c0_13 = arith.constant 0 : index
    %15 = vector.load %arg8[%c0_12, %c0_13] : memref<16x256xf32, #tpu.memory_space<vmem>>, vector<16x256xf32>
    tpu.vector_store %arg8[%c0_12, %c0_13], %14 {strides = array<i32>} : memref<16x256xf32, #tpu.memory_space<vmem>>, vector<16x256xf32>,
    %c0_i32_14 = arith.constant 0 : i32
    %16 = arith.cmpi eq, %arg1, %c0_i32_14 : i32
    %17 = arith.extui %16 : i1 to i32
    %c0_i32_15 = arith.constant 0 : i32
    %18 = arith.cmpi ne, %17, %c0_i32_15 : i32
    scf.if %18 {
      %c0_16 = arith.constant 0 : index
      %c0_17 = arith.constant 0 : index
      %19 = vector.load %arg8[%c0_16, %c0_17] : memref<16x256xf32, #tpu.memory_space<vmem>>, vector<16x256xf32>
      %c0_18 = arith.constant 0 : index
      %c0_19 = arith.constant 0 : index
      %20 = vector.load %arg6[%c0_18, %c0_19] : memref<1x256xf32, #tpu.memory_space<vmem>>, vector<1x256xf32>
      %21 = vector.broadcast %20 : vector<1x256xf32> to vector<16x256xf32>
      %22 = arith.addf %19, %21 : vector<16x256xf32>
      %c0_20 = arith.constant 0 : index
      %c0_21 = arith.constant 0 : index
      %23 = vector.load %arg7[%c0_20, %c0_21] : memref<16x256xf32, #tpu.memory_space<vmem>>, vector<16x256xf32>
      tpu.vector_store %arg7[%c0_20, %c0_21], %22 {strides = array<i32>} : memref<16x256xf32, #tpu.memory_space<vmem>>, vector<16x256xf32>,
    } else {
    }
    return
  }
  func.func @transform_0(%arg0: i32, %arg1: i32) -> (i32, i32) {
    %c0_i32 = arith.constant 0 : i32
    %c0_i32_0 = arith.constant 0 : i32
    return %arg0, %c0_i32 : i32, i32
  }
  func.func @transform_1(%arg0: i32, %arg1: i32) -> (i32, i32) {
    %c0_i32 = arith.constant 0 : i32
    %c0_i32_0 = arith.constant 0 : i32
    return %c0_i32, %arg1 : i32, i32
  }
  func.func @transform_2(%arg0: i32, %arg1: i32) -> (i32, i32) {
    %c0_i32 = arith.constant 0 : i32
    %c0_i32_0 = arith.constant 0 : i32
    return %c0_i32, %arg1 : i32, i32
  }
  func.func @transform_3(%arg0: i32, %arg1: i32) -> (i32, i32) {
    %c0_i32 = arith.constant 0 : i32
    %c0_i32_0 = arith.constant 0 : i32
    return %arg1, %c0_i32 : i32, i32
  }
  func.func @transform_4(%arg0: i32, %arg1: i32) -> (i32, i32) {
    %c0_i32 = arith.constant 0 : i32
    %c0_i32_0 = arith.constant 0 : i32
    %c0_i32_1 = arith.constant 0 : i32
    return %c0_i32, %c0_i32_0 : i32, i32
  }
  func.func @transform_5(%arg0: i32, %arg1: i32) -> (i32, i32) {
    %c0_i32 = arith.constant 0 : i32
    %c0_i32_0 = arith.constant 0 : i32
    return %arg0, %c0_i32 : i32, i32
  }
}

</mosaic_0001>

<llo_original>
// kernel: mlp_fw.1
$region0: #{mlp_fw.1}
  #allocation0 [shape = 'u32[]', space=smem, size = 0x4, offset = 0x4, fixed_abs, tag = 'smem constant byte address 0x4 - core index']
  #allocation1 [shape = 'u32[144,128]{1,0:T(1,128)}', space=vmem, size = 0x12000, scoped, tag = 'internal scratch']
  #allocation2 [shape = 'f32[16,256]{1,0:T(8,128)}', space=vmem, size = 0x4000, scoped, tag = 'scratch operand']
  %s0 = inlined_call_operand.vmem [shape: f32[16,256], index: 0, kind: input, shape index: {}]
  %s1 = inlined_call_operand.hbm [shape: f32[256,256], index: 1, kind: input, shape index: {}]
  %s2 = inlined_call_operand.vmem [shape: f32[1,256], index: 2, kind: input, shape index: {}]
  %s3 = inlined_call_operand.hbm [shape: f32[256,256], index: 3, kind: input, shape index: {}]
  %s4 = inlined_call_operand.vmem [shape: f32[1,256], index: 4, kind: input, shape index: {}]
  %s5 = inlined_call_operand.vmem [shape: f32[16,256], index: 5, kind: output, shape index: {}]
  %s6 = sld [smem:[#allocation0]]
  $region46: #{mlp_fw.1} parent=0
    _
  %s8 = ssub.s32 1, %s6
  %s9 = scalar_select 0, %s8, %s6
  $region1: #{mlp_fw.1} parent=0
    #allocation3 [shape = 'u8[262144]{0}', space=vmem, size = 0x40000, scoped, tag = 'input window, operand 1, single buffered']
    #allocation4 [shape = 's32[1]{0}', space=sflag, size = 0x4, scoped, tag = 'scoped memory for mlp_fw.1']
    #allocation5 [shape = 'u8[262144]{0}', space=vmem, size = 0x40000, scoped, tag = 'input window, operand 3, single buffered']
    #allocation6 [shape = 's32[1]{0}', space=sflag, size = 0x4, scoped, tag = 'scoped memory for mlp_fw.1']
    %10 = vsyncpa [#allocation4], 0
    %11 = vsyncpa [#allocation6], 0
    // Predicated region
    $region2: #{mlp_fw.1} parent=1 // pred_check
      _
    $region3: #{mlp_fw.1} parent=1 // pred_check_branch
      %13 = sbr.rel (0) target = $region5
    $region4: #{mlp_fw.1} parent=1 // pred_region
      _
    $region5: #{mlp_fw.1} parent=1 // pred_fallthru
      _
    // Predicated region
    $region6: #{mlp_fw.1} parent=1 // pred_check
      _
    $region7: #{mlp_fw.1} parent=1 // pred_check_branch
      %15 = sbr.rel (0) target = $region9
    $region8: #{mlp_fw.1} parent=1 // pred_region
      %s17 = ssub.s32 8192, 8192
      %18 = vsyncadd [#allocation4], %s17
      %s19 = sshll.u32 [#allocation3], 4
      %s20 = int_to_ptr.vmem [resolvable:$true] %s19
      %25 = dma.hbm_to_vmem [thread:$0]  %s1, 8192, %s20, [#allocation4], 256, 256, 16
    $region9: #{mlp_fw.1} parent=1 // pred_fallthru
      _
    // Predicated region
    $region10: #{mlp_fw.1} parent=1 // pred_check
      _
    $region11: #{mlp_fw.1} parent=1 // pred_check_branch
      %27 = sbr.rel (0) target = $region13
    $region12: #{mlp_fw.1} parent=1 // pred_region
      _
    $region13: #{mlp_fw.1} parent=1 // pred_fallthru
      _
    // Predicated region
    $region14: #{mlp_fw.1} parent=1 // pred_check
      _
    $region15: #{mlp_fw.1} parent=1 // pred_check_branch
      %29 = sbr.rel (0) target = $region17
    $region16: #{mlp_fw.1} parent=1 // pred_region
      %s31 = ssub.s32 8192, 8192
      %32 = vsyncadd [#allocation6], %s31
      %s33 = sshll.u32 [#allocation5], 4
      %s34 = int_to_ptr.vmem [resolvable:$true] %s33
      %39 = dma.hbm_to_vmem [thread:$0]  %s3, 8192, %s34, [#allocation6], 256, 256, 16
    $region17: #{mlp_fw.1} parent=1 // pred_fallthru
      _
    // Predicated region
    $region18: #{mlp_fw.1} parent=1 // pred_check
      _
    $region19: #{mlp_fw.1} parent=1 // pred_check_branch
      %41 = sbr.rel (0) target = $region21
    $region20: #{mlp_fw.1} parent=1 // pred_region
      _
    $region21: #{mlp_fw.1} parent=1 // pred_fallthru
      _
    // Predicated region
    $region22: #{mlp_fw.1} parent=1 // pred_check
      _
    $region23: #{mlp_fw.1} parent=1 // pred_check_branch
      %43 = sbr.rel (0) target = $region25
    $region24: #{mlp_fw.1} parent=1 // pred_region
      %44 = dma.done [#allocation4], 8192
    $region25: #{mlp_fw.1} parent=1 // pred_fallthru
      _
    // Predicated region
    $region26: #{mlp_fw.1} parent=1 // pred_check
      _
    $region27: #{mlp_fw.1} parent=1 // pred_check_branch
      %46 = sbr.rel (0) target = $region29
    $region28: #{mlp_fw.1} parent=1 // pred_region
      %47 = dma.done [#allocation6], 8192
    $region29: #{mlp_fw.1} parent=1 // pred_fallthru
      _
    %p48 = scmp.eq.s32.totalorder 0, 0
    // Predicated region
    $region30: #{mlp_fw.1} parent=1 // pred_check
      %p49 = pneg %p48
    $region31: #{mlp_fw.1} parent=1 // pred_check_branch
      %51 = sbr.rel (%p49) target = $region33
    $region32: #{mlp_fw.1} parent=1 // pred_region
      %52 = vst [vmem:[#allocation2] sm:$0xff] 0.0
      %53 = vst [vmem:[#allocation2 + $0x8] sm:$0xff] 0.0
      %54 = vst [vmem:[#allocation2 + $0x10] sm:$0xff] 0.0
      %55 = vst [vmem:[#allocation2 + $0x18] sm:$0xff] 0.0
    $region33: #{mlp_fw.1} parent=1 // pred_fallthru
      _
    %v56 = vld [vmem:[%s0] sm:$0xff]
    %v57 = vld [vmem:[%s0 + $0x8] sm:$0xff]
    %v58 = vld [vmem:[%s0 + $0x10] sm:$0xff]
    %v59 = vld [vmem:[%s0 + $0x18] sm:$0xff]
    %v60 = vld [vmem:[#allocation3] sm:$0xff]
    %v61 = vld [vmem:[#allocation3 + $0x8] sm:$0xff]
    %v62 = vld [vmem:[#allocation3 + $0x10] sm:$0xff]
    %v63 = vld [vmem:[#allocation3 + $0x18] sm:$0xff]
    %v64 = vld [vmem:[#allocation3 + $0x20] sm:$0xff]
    %v65 = vld [vmem:[#allocation3 + $0x28] sm:$0xff]
    %v66 = vld [vmem:[#allocation3 + $0x30] sm:$0xff]
    %v67 = vld [vmem:[#allocation3 + $0x38] sm:$0xff]
    %v68 = vld [vmem:[#allocation3 + $0x40] sm:$0xff]
    %v69 = vld [vmem:[#allocation3 + $0x48] sm:$0xff]
    %v70 = vld [vmem:[#allocation3 + $0x50] sm:$0xff]
    %v71 = vld [vmem:[#allocation3 + $0x58] sm:$0xff]
    %v72 = vld [vmem:[#allocation3 + $0x60] sm:$0xff]
    %v73 = vld [vmem:[#allocation3 + $0x68] sm:$0xff]
    %v74 = vld [vmem:[#allocation3 + $0x70] sm:$0xff]
    %v75 = vld [vmem:[#allocation3 + $0x78] sm:$0xff]
    %v76 = vld [vmem:[#allocation3 + $0x80] sm:$0xff]
    %v77 = vld [vmem:[#allocation3 + $0x88] sm:$0xff]
    %v78 = vld [vmem:[#allocation3 + $0x90] sm:$0xff]
    %v79 = vld [vmem:[#allocation3 + $0x98] sm:$0xff]
    %v80 = vld [vmem:[#allocation3 + $0xa0] sm:$0xff]
    %v81 = vld [vmem:[#allocation3 + $0xa8] sm:$0xff]
    %v82 = vld [vmem:[#allocation3 + $0xb0] sm:$0xff]
    %v83 = vld [vmem:[#allocation3 + $0xb8] sm:$0xff]
    %v84 = vld [vmem:[#allocation3 + $0xc0] sm:$0xff]
    %v85 = vld [vmem:[#allocation3 + $0xc8] sm:$0xff]
    %v86 = vld [vmem:[#allocation3 + $0xd0] sm:$0xff]
    %v87 = vld [vmem:[#allocation3 + $0xd8] sm:$0xff]
    %v88 = vld [vmem:[#allocation3 + $0xe0] sm:$0xff]
    %v89 = vld [vmem:[#allocation3 + $0xe8] sm:$0xff]
    %v90 = vld [vmem:[#allocation3 + $0xf0] sm:$0xff]
    %v91 = vld [vmem:[#allocation3 + $0xf8] sm:$0xff]
    %v92 = vld [vmem:[#allocation3 + $0x100] sm:$0xff]
    %v93 = vld [vmem:[#allocation3 + $0x108] sm:$0xff]
    %v94 = vld [vmem:[#allocation3 + $0x110] sm:$0xff]
    %v95 = vld [vmem:[#allocation3 + $0x118] sm:$0xff]
    %v96 = vld [vmem:[#allocation3 + $0x120] sm:$0xff]
    %v97 = vld [vmem:[#allocation3 + $0x128] sm:$0xff]
    %v98 = vld [vmem:[#allocation3 + $0x130] sm:$0xff]
    %v99 = vld [vmem:[#allocation3 + $0x138] sm:$0xff]
    %v100 = vld [vmem:[#allocation3 + $0x140] sm:$0xff]
    %v101 = vld [vmem:[#allocation3 + $0x148] sm:$0xff]
    %v102 = vld [vmem:[#allocation3 + $0x150] sm:$0xff]
    %v103 = vld [vmem:[#allocation3 + $0x158] sm:$0xff]
    %v104 = vld [vmem:[#allocation3 + $0x160] sm:$0xff]
    %v105 = vld [vmem:[#allocation3 + $0x168] sm:$0xff]
    %v106 = vld [vmem:[#allocation3 + $0x170] sm:$0xff]
    %v107 = vld [vmem:[#allocation3 + $0x178] sm:$0xff]
    %v108 = vld [vmem:[#allocation3 + $0x180] sm:$0xff]
    %v109 = vld [vmem:[#allocation3 + $0x188] sm:$0xff]
    %v110 = vld [vmem:[#allocation3 + $0x190] sm:$0xff]
    %v111 = vld [vmem:[#allocation3 + $0x198] sm:$0xff]
    %v112 = vld [vmem:[#allocation3 + $0x1a0] sm:$0xff]
    %v113 = vld [vmem:[#allocation3 + $0x1a8] sm:$0xff]
    %v114 = vld [vmem:[#allocation3 + $0x1b0] sm:$0xff]
    %v115 = vld [vmem:[#allocation3 + $0x1b8] sm:$0xff]
    %v116 = vld [vmem:[#allocation3 + $0x1c0] sm:$0xff]
    %v117 = vld [vmem:[#allocation3 + $0x1c8] sm:$0xff]
    %v118 = vld [vmem:[#allocation3 + $0x1d0] sm:$0xff]
    %v119 = vld [vmem:[#allocation3 + $0x1d8] sm:$0xff]
    %v120 = vld [vmem:[#allocation3 + $0x1e0] sm:$0xff]
    %v121 = vld [vmem:[#allocation3 + $0x1e8] sm:$0xff]
    %v122 = vld [vmem:[#allocation3 + $0x1f0] sm:$0xff]
    %v123 = vld [vmem:[#allocation3 + $0x1f8] sm:$0xff]
    %v124 = vld [vmem:[%s2] sm:$0x3]
    %v126 = vlaneseq
    %v127 = vshrl.u32 %v126, 7
    %v128 = vsub.s32 0, %v127
    %v129 = vrot.slane %v124, %v128
    %v130 = vlaneseq
    %v131 = vshrl.u32 %v130, 7
    %v132 = vsub.s32 1, %v131
    %v133 = vrot.slane %v124, %v132
    %136 = vmatprep.subr.mxu0 %v61
    %137 = vmatpush1.msra.mxu0 %v60
    %138 = vmatprep.subr.mxu0 %v63
    %139 = vmatpush1.msra.mxu0 %v62
    %140 = vmatprep.subr.mxu0 %v65
    %141 = vmatpush1.msra.mxu0 %v64
    %142 = vmatprep.subr.mxu0 %v67
    %143 = vmatpush1.msra.mxu0 %v66
    %144 = vmatprep.subr.mxu0 %v69
    %145 = vmatpush1.msra.mxu0 %v68
    %146 = vmatprep.subr.mxu0 %v71
    %147 = vmatpush1.msra.mxu0 %v70
    %148 = vmatprep.subr.mxu0 %v73
    %149 = vmatpush1.msra.mxu0 %v72
    %150 = vmatprep.subr.mxu0 %v75
    %151 = vmatpush1.msra.mxu0 %v74
    %152 = vmatprep.subr.mxu0 %v77
    %153 = vmatpush1.msra.mxu0 %v76
    %154 = vmatprep.subr.mxu0 %v79
    %155 = vmatpush1.msra.mxu0 %v78
    %156 = vmatprep.subr.mxu0 %v81
    %157 = vmatpush1.msra.mxu0 %v80
    %158 = vmatprep.subr.mxu0 %v83
    %159 = vmatpush1.msra.mxu0 %v82
    %160 = vmatprep.subr.mxu0 %v85
    %161 = vmatpush1.msra.mxu0 %v84
    %162 = vmatprep.subr.mxu0 %v87
    %163 = vmatpush1.msra.mxu0 %v86
    %164 = vmatprep.subr.mxu0 %v89
    %165 = vmatpush1.msra.mxu0 %v88
    %166 = vmatprep.subr.mxu0 %v91
    %167 = vmatpush1.msra.mxu0 %v90
    %168 = vmatprep.subr.mxu0 %v93
    %169 = vmatpush1.msra.mxu0 %v92
    %170 = vmatprep.subr.mxu0 %v95
    %171 = vmatpush1.msra.mxu0 %v94
    %172 = vmatprep.subr.mxu0 %v97
    %173 = vmatpush1.msra.mxu0 %v96
    %174 = vmatprep.subr.mxu0 %v99
    %175 = vmatpush1.msra.mxu0 %v98
    %176 = vmatprep.subr.mxu0 %v101
    %177 = vmatpush1.msra.mxu0 %v100
    %178 = vmatprep.subr.mxu0 %v103
    %179 = vmatpush1.msra.mxu0 %v102
    %180 = vmatprep.subr.mxu0 %v105
    %181 = vmatpush1.msra.mxu0 %v104
    %182 = vmatprep.subr.mxu0 %v107
    %183 = vmatpush1.msra.mxu0 %v106
    %184 = vmatprep.subr.mxu0 %v109
    %185 = vmatpush1.msra.mxu0 %v108
    %186 = vmatprep.subr.mxu0 %v111
    %187 = vmatpush1.msra.mxu0 %v110
    %188 = vmatprep.subr.mxu0 %v113
    %189 = vmatpush1.msra.mxu0 %v112
    %190 = vmatprep.subr.mxu0 %v115
    %191 = vmatpush1.msra.mxu0 %v114
    %192 = vmatprep.subr.mxu0 %v117
    %193 = vmatpush1.msra.mxu0 %v116
    %194 = vmatprep.subr.mxu0 %v119
    %195 = vmatpush1.msra.mxu0 %v118
    %196 = vmatprep.subr.mxu0 %v121
    %197 = vmatpush1.msra.mxu0 %v120
    %198 = vmatprep.subr.mxu0 %v123
    %199 = vmatpush1.msra.mxu0 %v122
    %200 = vmatprep.mubr.f32.mxu0 %v57
    %201 = vmatmul.mubr.f32.gmra.mrb[0].mxu0 %v56
    %v202 = vpop.f32.mrb[0].mxu0
    %v203 = vadd.f32 %v129, %v202
    %v204 = vpop.f32.mrb[0].mxu0
    %v205 = vadd.f32 %v133, %v204
    %206 = vmatprep.mubr.f32.mxu0 %v59
    %207 = vmatmul.mubr.f32.gmra.mrb[0].mxu0 %v58
    %v208 = vpop.f32.mrb[0].mxu0
    %v209 = vadd.f32 %v129, %v208
    %v210 = vpop.f32.mrb[0].mxu0
    %v211 = vadd.f32 %v133, %v210
    %212 = vdwg.mxu0
    %v213 = vmax.f32 %v203, 0.0
    %v214 = vmax.f32 %v205, 0.0
    %v215 = vmax.f32 %v209, 0.0
    %v216 = vmax.f32 %v211, 0.0
    %v217 = vld [vmem:[#allocation2] sm:$0xff]
    %v218 = vld [vmem:[#allocation2 + $0x8] sm:$0xff]
    %v219 = vld [vmem:[#allocation2 + $0x10] sm:$0xff]
    %v220 = vld [vmem:[#allocation2 + $0x18] sm:$0xff]
    %v221 = vld [vmem:[#allocation5] sm:$0xff]
    %v222 = vld [vmem:[#allocation5 + $0x8] sm:$0xff]
    %v223 = vld [vmem:[#allocation5 + $0x10] sm:$0xff]
    %v224 = vld [vmem:[#allocation5 + $0x18] sm:$0xff]
    %v225 = vld [vmem:[#allocation5 + $0x20] sm:$0xff]
    %v226 = vld [vmem:[#allocation5 + $0x28] sm:$0xff]
    %v227 = vld [vmem:[#allocation5 + $0x30] sm:$0xff]
    %v228 = vld [vmem:[#allocation5 + $0x38] sm:$0xff]
    %v229 = vld [vmem:[#allocation5 + $0x40] sm:$0xff]
    %v230 = vld [vmem:[#allocation5 + $0x48] sm:$0xff]
    %v231 = vld [vmem:[#allocation5 + $0x50] sm:$0xff]
    %v232 = vld [vmem:[#allocation5 + $0x58] sm:$0xff]
    %v233 = vld [vmem:[#allocation5 + $0x60] sm:$0xff]
    %v234 = vld [vmem:[#allocation5 + $0x68] sm:$0xff]
    %v235 = vld [vmem:[#allocation5 + $0x70] sm:$0xff]
    %v236 = vld [vmem:[#allocation5 + $0x78] sm:$0xff]
    %v237 = vld [vmem:[#allocation5 + $0x80] sm:$0xff]
    %v238 = vld [vmem:[#allocation5 + $0x88] sm:$0xff]
    %v239 = vld [vmem:[#allocation5 + $0x90] sm:$0xff]
    %v240 = vld [vmem:[#allocation5 + $0x98] sm:$0xff]
    %v241 = vld [vmem:[#allocation5 + $0xa0] sm:$0xff]
    %v242 = vld [vmem:[#allocation5 + $0xa8] sm:$0xff]
    %v243 = vld [vmem:[#allocation5 + $0xb0] sm:$0xff]
    %v244 = vld [vmem:[#allocation5 + $0xb8] sm:$0xff]
    %v245 = vld [vmem:[#allocation5 + $0xc0] sm:$0xff]
    %v246 = vld [vmem:[#allocation5 + $0xc8] sm:$0xff]
    %v247 = vld [vmem:[#allocation5 + $0xd0] sm:$0xff]
    %v248 = vld [vmem:[#allocation5 + $0xd8] sm:$0xff]
    %v249 = vld [vmem:[#allocation5 + $0xe0] sm:$0xff]
    %v250 = vld [vmem:[#allocation5 + $0xe8] sm:$0xff]
    %v251 = vld [vmem:[#allocation5 + $0xf0] sm:$0xff]
    %v252 = vld [vmem:[#allocation5 + $0xf8] sm:$0xff]
    %v253 = vld [vmem:[#allocation5 + $0x100] sm:$0xff]
    %v254 = vld [vmem:[#allocation5 + $0x108] sm:$0xff]
    %v255 = vld [vmem:[#allocation5 + $0x110] sm:$0xff]
    %v256 = vld [vmem:[#allocation5 + $0x118] sm:$0xff]
    %v257 = vld [vmem:[#allocation5 + $0x120] sm:$0xff]
    %v258 = vld [vmem:[#allocation5 + $0x128] sm:$0xff]
    %v259 = vld [vmem:[#allocation5 + $0x130] sm:$0xff]
    %v260 = vld [vmem:[#allocation5 + $0x138] sm:$0xff]
    %v261 = vld [vmem:[#allocation5 + $0x140] sm:$0xff]
    %v262 = vld [vmem:[#allocation5 + $0x148] sm:$0xff]
    %v263 = vld [vmem:[#allocation5 + $0x150] sm:$0xff]
    %v264 = vld [vmem:[#allocation5 + $0x158] sm:$0xff]
    %v265 = vld [vmem:[#allocation5 + $0x160] sm:$0xff]
    %v266 = vld [vmem:[#allocation5 + $0x168] sm:$0xff]
    %v267 = vld [vmem:[#allocation5 + $0x170] sm:$0xff]
    %v268 = vld [vmem:[#allocation5 + $0x178] sm:$0xff]
    %v269 = vld [vmem:[#allocation5 + $0x180] sm:$0xff]
    %v270 = vld [vmem:[#allocation5 + $0x188] sm:$0xff]
    %v271 = vld [vmem:[#allocation5 + $0x190] sm:$0xff]
    %v272 = vld [vmem:[#allocation5 + $0x198] sm:$0xff]
    %v273 = vld [vmem:[#allocation5 + $0x1a0] sm:$0xff]
    %v274 = vld [vmem:[#allocation5 + $0x1a8] sm:$0xff]
    %v275 = vld [vmem:[#allocation5 + $0x1b0] sm:$0xff]
    %v276 = vld [vmem:[#allocation5 + $0x1b8] sm:$0xff]
    %v277 = vld [vmem:[#allocation5 + $0x1c0] sm:$0xff]
    %v278 = vld [vmem:[#allocation5 + $0x1c8] sm:$0xff]
    %v279 = vld [vmem:[#allocation5 + $0x1d0] sm:$0xff]
    %v280 = vld [vmem:[#allocation5 + $0x1d8] sm:$0xff]
    %v281 = vld [vmem:[#allocation5 + $0x1e0] sm:$0xff]
    %v282 = vld [vmem:[#allocation5 + $0x1e8] sm:$0xff]
    %v283 = vld [vmem:[#allocation5 + $0x1f0] sm:$0xff]
    %v284 = vld [vmem:[#allocation5 + $0x1f8] sm:$0xff]
    %285 = vmatprep.subr.mxu0 %v222
    %286 = vmatpush1.msra.mxu0 %v221
    %287 = vmatprep.subr.mxu0 %v224
    %288 = vmatpush1.msra.mxu0 %v223
    %289 = vmatprep.subr.mxu0 %v226
    %290 = vmatpush1.msra.mxu0 %v225
    %291 = vmatprep.subr.mxu0 %v228
    %292 = vmatpush1.msra.mxu0 %v227
    %293 = vmatprep.subr.mxu0 %v230
    %294 = vmatpush1.msra.mxu0 %v229
    %295 = vmatprep.subr.mxu0 %v232
    %296 = vmatpush1.msra.mxu0 %v231
    %297 = vmatprep.subr.mxu0 %v234
    %298 = vmatpush1.msra.mxu0 %v233
    %299 = vmatprep.subr.mxu0 %v236
    %300 = vmatpush1.msra.mxu0 %v235
    %301 = vmatprep.subr.mxu0 %v238
    %302 = vmatpush1.msra.mxu0 %v237
    %303 = vmatprep.subr.mxu0 %v240
    %304 = vmatpush1.msra.mxu0 %v239
    %305 = vmatprep.subr.mxu0 %v242
    %306 = vmatpush1.msra.mxu0 %v241
    %307 = vmatprep.subr.mxu0 %v244
    %308 = vmatpush1.msra.mxu0 %v243
    %309 = vmatprep.subr.mxu0 %v246
    %310 = vmatpush1.msra.mxu0 %v245
    %311 = vmatprep.subr.mxu0 %v248
    %312 = vmatpush1.msra.mxu0 %v247
    %313 = vmatprep.subr.mxu0 %v250
    %314 = vmatpush1.msra.mxu0 %v249
    %315 = vmatprep.subr.mxu0 %v252
    %316 = vmatpush1.msra.mxu0 %v251
    %317 = vmatprep.subr.mxu0 %v254
    %318 = vmatpush1.msra.mxu0 %v253
    %319 = vmatprep.subr.mxu0 %v256
    %320 = vmatpush1.msra.mxu0 %v255
    %321 = vmatprep.subr.mxu0 %v258
    %322 = vmatpush1.msra.mxu0 %v257
    %323 = vmatprep.subr.mxu0 %v260
    %324 = vmatpush1.msra.mxu0 %v259
    %325 = vmatprep.subr.mxu0 %v262
    %326 = vmatpush1.msra.mxu0 %v261
    %327 = vmatprep.subr.mxu0 %v264
    %328 = vmatpush1.msra.mxu0 %v263
    %329 = vmatprep.subr.mxu0 %v266
    %330 = vmatpush1.msra.mxu0 %v265
    %331 = vmatprep.subr.mxu0 %v268
    %332 = vmatpush1.msra.mxu0 %v267
    %333 = vmatprep.subr.mxu0 %v270
    %334 = vmatpush1.msra.mxu0 %v269
    %335 = vmatprep.subr.mxu0 %v272
    %336 = vmatpush1.msra.mxu0 %v271
    %337 = vmatprep.subr.mxu0 %v274
    %338 = vmatpush1.msra.mxu0 %v273
    %339 = vmatprep.subr.mxu0 %v276
    %340 = vmatpush1.msra.mxu0 %v275
    %341 = vmatprep.subr.mxu0 %v278
    %342 = vmatpush1.msra.mxu0 %v277
    %343 = vmatprep.subr.mxu0 %v280
    %344 = vmatpush1.msra.mxu0 %v279
    %345 = vmatprep.subr.mxu0 %v282
    %346 = vmatpush1.msra.mxu0 %v281
    %347 = vmatprep.subr.mxu0 %v284
    %348 = vmatpush1.msra.mxu0 %v283
    %349 = vmatprep.mubr.f32.mxu0 %v214
    %350 = vmatmul.mubr.f32.gmra.mrb[0].mxu0 %v213
    %v351 = vpop.f32.mrb[0].mxu0
    %v352 = vadd.f32 0.0, %v351
    %v353 = vpop.f32.mrb[0].mxu0
    %v354 = vadd.f32 0.0, %v353
    %355 = vmatprep.mubr.f32.mxu0 %v216
    %356 = vmatmul.mubr.f32.gmra.mrb[0].mxu0 %v215
    %v357 = vpop.f32.mrb[0].mxu0
    %v358 = vadd.f32 0.0, %v357
    %v359 = vpop.f32.mrb[0].mxu0
    %v360 = vadd.f32 0.0, %v359
    %361 = vdwg.mxu0
    %v362 = vadd.f32 %v217, %v352
    %v363 = vadd.f32 %v218, %v354
    %v364 = vadd.f32 %v219, %v358
    %v365 = vadd.f32 %v220, %v360
    %366 = vst [vmem:[#allocation2] sm:$0xff] %v362
    %367 = vst [vmem:[#allocation2 + $0x8] sm:$0xff] %v363
    %368 = vst [vmem:[#allocation2 + $0x10] sm:$0xff] %v364
    %369 = vst [vmem:[#allocation2 + $0x18] sm:$0xff] %v365
    // Predicated region
    $region34: #{mlp_fw.1} parent=1 // pred_check
      %p370 = pneg %p48
    $region35: #{mlp_fw.1} parent=1 // pred_check_branch
      %372 = sbr.rel (%p370) target = $region37
    $region36: #{mlp_fw.1} parent=1 // pred_region
      %v373 = vld [vmem:[#allocation2] sm:$0xff]
      %v374 = vld [vmem:[#allocation2 + $0x8] sm:$0xff]
      %v375 = vld [vmem:[#allocation2 + $0x10] sm:$0xff]
      %v376 = vld [vmem:[#allocation2 + $0x18] sm:$0xff]
      %v377 = vld [vmem:[%s4] sm:$0x3]
      %v379 = vlaneseq
      %v380 = vshrl.u32 %v379, 7
      %v381 = vsub.s32 0, %v380
      %v382 = vrot.slane %v377, %v381
      %v383 = vlaneseq
      %v384 = vshrl.u32 %v383, 7
      %v385 = vsub.s32 1, %v384
      %v386 = vrot.slane %v377, %v385
      %v389 = vadd.f32 %v373, %v382
      %v390 = vadd.f32 %v374, %v386
      %v391 = vadd.f32 %v375, %v382
      %v392 = vadd.f32 %v376, %v386
      %393 = vst [vmem:[%s5] sm:$0xff] %v389
      %394 = vst [vmem:[%s5 + $0x8] sm:$0xff] %v390
      %395 = vst [vmem:[%s5 + $0x10] sm:$0xff] %v391
      %396 = vst [vmem:[%s5 + $0x18] sm:$0xff] %v392
    $region37: #{mlp_fw.1} parent=1 // pred_fallthru
      _
    // Predicated region
    $region38: #{mlp_fw.1} parent=1 // pred_check
      _
    $region39: #{mlp_fw.1} parent=1 // pred_check_branch
      %398 = sbr.rel (0) target = $region41
    $region40: #{mlp_fw.1} parent=1 // pred_region
      _
    $region41: #{mlp_fw.1} parent=1 // pred_fallthru
      _
    // Predicated region
    $region42: #{mlp_fw.1} parent=1 // pred_check
      _
    $region43: #{mlp_fw.1} parent=1 // pred_check_branch
      %400 = sbr.rel (0) target = $region45
    $region44: #{mlp_fw.1} parent=1 // pred_region
      _
    $region45: #{mlp_fw.1} parent=1 // pred_fallthru
      _
    %401 = vsyncpa [#allocation4], 1
    %402 = vsyncpa [#allocation6], 1

</llo_original>
